<compile_context>
chip_gen: v7x
topology: tpu7x:2x2x1
jax: 0.10.0
libtpu: 0.0.40
codegen_flags: <defaults>
</compile_context>

<pallas_src>
import functools

import jax
import jax.numpy as jnp
from jax.experimental import pallas as pl
from jax.experimental.pallas import tpu as pltpu


def _round_up(x, m):
    return (x + m - 1) // m * m


def _sublane_align(dtype):
    # 8 rows for 4-byte dtypes, 16 for bf16, 32 for int8/fp8.
    return max(8, 32 // jnp.dtype(dtype).itemsize)


def _fusion_kernel(num_modalities, hidden_dim, *refs):
    """refs = (x_0..x_{M-1}, w_0..w_{M-1}, b_0..b_{M-1}, out_ref).

    x_i: [TB, D_i], w_i: [D_i, H], b_i: [1, H], out: [TB, (M+1)*H].
    out[:, i*H:(i+1)*H] = relu(x_i @ w_i + b_i)
    out[:, M*H:]        = sum_i relu(x_i @ w_i + b_i)   (operation='add')
    """
    M, H = num_modalities, hidden_dim
    x_refs = refs[:M]
    w_refs = refs[M:2 * M]
    b_refs = refs[2 * M:3 * M]
    out_ref = refs[3 * M]

    z = None
    for i in range(M):
        # Per-modality matmul on the MXU with f32 accumulation.
        h = jnp.dot(x_refs[i][...], w_refs[i][...],
                    preferred_element_type=jnp.float32)
        h = jnp.maximum(h + b_refs[i][...], 0.0)       # bias + ReLU (VPU)
        # Write this modality's segment directly (static column slice).
        out_ref[:, i * H:(i + 1) * H] = h.astype(out_ref.dtype)
        z = h if z is None else z + h
    out_ref[:, M * H:(M + 1) * H] = z.astype(out_ref.dtype)


def arithmetic_fusion(xs, ws, bs, *, hidden_dim, batch_tile=512):
    """xs: list of [B, D_i]; ws: list of [D_i, H]; bs: list of [H].

    Returns [B, (num_modalities + 1) * hidden_dim]  (cat(outs + [z], dim=1)).
    """
    M = len(xs)
    B = xs[0].shape[0]
    H = hidden_dim
    dims = [int(x.shape[1]) for x in xs]

    compute_dtype = xs[0].dtype            # pin the compute dtype explicitly
    out_dtype = compute_dtype
    itemsize = jnp.dtype(compute_dtype).itemsize
    sub = _sublane_align(compute_dtype)

    xs = [x.astype(compute_dtype) for x in xs]
    ws = [w.astype(compute_dtype) for w in ws]
    bs = [b.reshape(1, H).astype(jnp.float32) for b in bs]   # f32 bias add

    # ---- batch tiling: weights stay resident, batch tiles are pipelined ----
    Bp = _round_up(B, sub)
    TB = min(batch_tile, Bp)
    # v7x megacore: give the second TensorCore work (>= 2 grid steps) when the
    # sublane-aligned batch splits cleanly in two.
    if TB == Bp and Bp >= 2 * sub and (Bp // 2) % sub == 0:
        TB = Bp // 2
    Bp = _round_up(Bp, TB)
    if Bp != B:
        xs = [jnp.pad(x, ((0, Bp - B), (0, 0))) for x in xs]

    out_cols = (M + 1) * H

    in_specs = (
        [pl.BlockSpec((TB, d), lambda i: (i, 0)) for d in dims]       # x tiles
        + [pl.BlockSpec((d, H), lambda i: (0, 0)) for d in dims]      # resident W
        + [pl.BlockSpec((1, H), lambda i: (0, 0)) for _ in dims]      # resident b
    )
    out_spec = pl.BlockSpec((TB, out_cols), lambda i: (i, 0))

    # VMEM budget: double-buffered x/out batch tiles, resident (double-buffered)
    # W/b, and f32 h/z temporaries; generous 2x headroom, capped sanely.
    vmem_bytes = (
        2 * TB * sum(dims) * itemsize
        + 2 * sum(d * H for d in dims) * itemsize
        + 2 * M * H * 4
        + 2 * TB * out_cols * itemsize
        + 2 * M * TB * H * 4
    )
    vmem_limit = int(min(64 * 1024 * 1024, max(16 * 1024 * 1024, 2 * vmem_bytes)))

    flops = 2 * Bp * sum(d * H for d in dims) + 3 * Bp * M * H
    bytes_accessed = (
        Bp * sum(dims) * itemsize
        + sum(d * H for d in dims) * itemsize
        + M * H * 4
        + Bp * out_cols * itemsize
    )

    kernel = functools.partial(_fusion_kernel, M, H)

    out = pl.pallas_call(
        kernel,
        grid=(Bp // TB,),
        in_specs=in_specs,
        out_specs=out_spec,
        out_shape=jax.ShapeDtypeStruct((Bp, out_cols), out_dtype),
        compiler_params=pltpu.CompilerParams(
            dimension_semantics=("parallel",),
            vmem_limit_bytes=vmem_limit),
        cost_estimate=pl.CostEstimate(
            flops=int(flops), transcendentals=0,
            bytes_accessed=int(bytes_accessed)),
    )(*xs, *ws, *bs)

    # Strip batch padding only if any was added (no-op copy otherwise avoided).
    return out if Bp == B else out[:B]


if __name__ == "__main__":
    # Small shapes consistent with the module:
    #   num_modalities = 2, hidden_dim = 32, batch = 8
    #   modality input dims (LazyLinear infers these): 16 and 24
    B = 8
    hidden_dim = 32
    in_dims = [16, 24]
    M = len(in_dims)

    key = jax.random.PRNGKey(0)
    keys = jax.random.split(key, 3 * M)

    xs, ws, bs = [], [], []
    for i, d in enumerate(in_dims):
        xs.append(jax.random.normal(keys[3 * i + 0], (B, d), dtype=jnp.float32))
        # Deterministic "nn.Linear" params (synthetic init, not a checkpoint).
        ws.append(jax.random.normal(keys[3 * i + 1], (d, hidden_dim),
                                    dtype=jnp.float32) * 0.1)
        bs.append(jax.random.normal(keys[3 * i + 2], (hidden_dim,),
                                    dtype=jnp.float32) * 0.1)

    out = arithmetic_fusion(xs, ws, bs, hidden_dim=hidden_dim)
    out = jax.block_until_ready(out)

    # Reference check in plain JAX (same math as the PyTorch forward).
    hs = [jnp.maximum(x @ w + b, 0.0) for x, w, b in zip(xs, ws, bs)]
    z = hs[0]
    for i in range(1, M):
        z = z + hs[i]
    ref = jnp.concatenate(hs + [z], axis=1)
    assert out.shape == (B, (M + 1) * hidden_dim)
    assert jnp.allclose(out, ref, atol=1e-5, rtol=1e-5)

    print("KERNEL_OK")
</pallas_src>

<mosaic_0001>
module attributes {stable_mosaic.version = 11 : i64} {
  func.func @_fusion_kernel(%arg0: i32, %arg1: memref<8x16xf32, #tpu.memory_space<vmem>>, %arg2: memref<8x24xf32, #tpu.memory_space<vmem>>, %arg3: memref<16x32xf32, #tpu.memory_space<vmem>>, %arg4: memref<24x32xf32, #tpu.memory_space<vmem>>, %arg5: memref<1x32xf32, #tpu.memory_space<vmem>>, %arg6: memref<1x32xf32, #tpu.memory_space<vmem>>, %arg7: memref<8x96xf32, #tpu.memory_space<vmem>>) attributes {dimension_semantics = [#tpu.dimension_semantics<parallel>], iteration_bounds = array<i64: 1>, scalar_prefetch = 0 : i64, scratch_operands = 0 : i64, tpu.core_type = #tpu.core_type<tc>, window_params = [{transform_indices = @transform_0, window_bounds = array<i64: 8, 16>}, {transform_indices = @transform_1, window_bounds = array<i64: 8, 24>}, {pipeline_mode = #tpu.pipeline_mode<synchronous>, transform_indices = @transform_2, window_bounds = array<i64: 16, 32>}, {pipeline_mode = #tpu.pipeline_mode<synchronous>, transform_indices = @transform_3, window_bounds = array<i64: 24, 32>}, {pipeline_mode = #tpu.pipeline_mode<synchronous>, transform_indices = @transform_4, window_bounds = array<i64: 1, 32>}, {pipeline_mode = #tpu.pipeline_mode<synchronous>, transform_indices = @transform_5, window_bounds = array<i64: 1, 32>}, {transform_indices = @transform_6, window_bounds = array<i64: 8, 96>}]} {
    %c0 = arith.constant 0 : index
    %c0_0 = arith.constant 0 : index
    %0 = vector.load %arg1[%c0, %c0_0] : memref<8x16xf32, #tpu.memory_space<vmem>>, vector<8x16xf32>
    %c0_1 = arith.constant 0 : index
    %c0_2 = arith.constant 0 : index
    %1 = vector.load %arg3[%c0_1, %c0_2] : memref<16x32xf32, #tpu.memory_space<vmem>>, vector<16x32xf32>
    %cst = arith.constant dense<0.000000e+00> : vector<8x32xf32>
    %2 = tpu.matmul %0, %1, %cst {dimension_numbers = #tpu.dot_dimension_numbers<[1], [0], [0], [1], [0, 0, 1, 1], [], []>} : vector<8x16xf32>, vector<16x32xf32>, vector<8x32xf32> -> vector<8x32xf32>
    %c0_3 = arith.constant 0 : index
    %c0_4 = arith.constant 0 : index
    %3 = vector.load %arg5[%c0_3, %c0_4] : memref<1x32xf32, #tpu.memory_space<vmem>>, vector<1x32xf32>
    %4 = vector.broadcast %3 : vector<1x32xf32> to vector<8x32xf32>
    %5 = arith.addf %2, %4 : vector<8x32xf32>
    %cst_5 = arith.constant 0.000000e+00 : f32
    %6 = vector.broadcast %cst_5 : f32 to vector<8x32xf32>
    %7 = arith.maximumf %5, %6 : vector<8x32xf32>
    %c0_6 = arith.constant 0 : index
    %c0_7 = arith.constant 0 : index
    %8 = vector.load %arg7[%c0_6, %c0_7] : memref<8x96xf32, #tpu.memory_space<vmem>>, vector<8x32xf32>
    tpu.vector_store %arg7[%c0_6, %c0_7], %7 {strides = array<i32>} : memref<8x96xf32, #tpu.memory_space<vmem>>, vector<8x32xf32>,
    %c0_8 = arith.constant 0 : index
    %c0_9 = arith.constant 0 : index
    %9 = vector.load %arg2[%c0_8, %c0_9] : memref<8x24xf32, #tpu.memory_space<vmem>>, vector<8x24xf32>
    %c0_10 = arith.constant 0 : index
    %c0_11 = arith.constant 0 : index
    %10 = vector.load %arg4[%c0_10, %c0_11] : memref<24x32xf32, #tpu.memory_space<vmem>>, vector<24x32xf32>
    %cst_12 = arith.constant dense<0.000000e+00> : vector<8x32xf32>
    %11 = tpu.matmul %9, %10, %cst_12 {dimension_numbers = #tpu.dot_dimension_numbers<[1], [0], [0], [1], [0, 0, 1, 1], [], []>} : vector<8x24xf32>, vector<24x32xf32>, vector<8x32xf32> -> vector<8x32xf32>
    %c0_13 = arith.constant 0 : index
    %c0_14 = arith.constant 0 : index
    %12 = vector.load %arg6[%c0_13, %c0_14] : memref<1x32xf32, #tpu.memory_space<vmem>>, vector<1x32xf32>
    %13 = vector.broadcast %12 : vector<1x32xf32> to vector<8x32xf32>
    %14 = arith.addf %11, %13 : vector<8x32xf32>
    %cst_15 = arith.constant 0.000000e+00 : f32
    %15 = vector.broadcast %cst_15 : f32 to vector<8x32xf32>
    %16 = arith.maximumf %14, %15 : vector<8x32xf32>
    %c0_16 = arith.constant 0 : index
    %c32 = arith.constant 32 : index
    %17 = vector.load %arg7[%c0_16, %c32] : memref<8x96xf32, #tpu.memory_space<vmem>>, vector<8x32xf32>
    tpu.vector_store %arg7[%c0_16, %c32], %16 {strides = array<i32>} : memref<8x96xf32, #tpu.memory_space<vmem>>, vector<8x32xf32>,
    %18 = arith.addf %7, %16 : vector<8x32xf32>
    %c0_17 = arith.constant 0 : index
    %c64 = arith.constant 64 : index
    %19 = vector.load %arg7[%c0_17, %c64] : memref<8x96xf32, #tpu.memory_space<vmem>>, vector<8x32xf32>
    tpu.vector_store %arg7[%c0_17, %c64], %18 {strides = array<i32>} : memref<8x96xf32, #tpu.memory_space<vmem>>, vector<8x32xf32>,
    return
  }
  func.func @transform_0(%arg0: i32) -> (i32, i32) {
    %c0_i32 = arith.constant 0 : i32
    %c0_i32_0 = arith.constant 0 : i32
    return %arg0, %c0_i32 : i32, i32
  }
  func.func @transform_1(%arg0: i32) -> (i32, i32) {
    %c0_i32 = arith.constant 0 : i32
    %c0_i32_0 = arith.constant 0 : i32
    return %arg0, %c0_i32 : i32, i32
  }
  func.func @transform_2(%arg0: i32) -> (i32, i32) {
    %c0_i32 = arith.constant 0 : i32
    %c0_i32_0 = arith.constant 0 : i32
    %c0_i32_1 = arith.constant 0 : i32
    return %c0_i32, %c0_i32_0 : i32, i32
  }
  func.func @transform_3(%arg0: i32) -> (i32, i32) {
    %c0_i32 = arith.constant 0 : i32
    %c0_i32_0 = arith.constant 0 : i32
    %c0_i32_1 = arith.constant 0 : i32
    return %c0_i32, %c0_i32_0 : i32, i32
  }
  func.func @transform_4(%arg0: i32) -> (i32, i32) {
    %c0_i32 = arith.constant 0 : i32
    %c0_i32_0 = arith.constant 0 : i32
    %c0_i32_1 = arith.constant 0 : i32
    return %c0_i32, %c0_i32_0 : i32, i32
  }
  func.func @transform_5(%arg0: i32) -> (i32, i32) {
    %c0_i32 = arith.constant 0 : i32
    %c0_i32_0 = arith.constant 0 : i32
    %c0_i32_1 = arith.constant 0 : i32
    return %c0_i32, %c0_i32_0 : i32, i32
  }
  func.func @transform_6(%arg0: i32) -> (i32, i32) {
    %c0_i32 = arith.constant 0 : i32
    %c0_i32_0 = arith.constant 0 : i32
    return %arg0, %c0_i32 : i32, i32
  }
}

</mosaic_0001>

<llo_original>
// kernel: tpu_custom_call.1
$region0: #{tpu_custom_call.1}
  #allocation0 [shape = 'u32[]', space=smem, size = 0x4, offset = 0x4, fixed_abs, tag = 'smem constant byte address 0x4 - core index']
  #allocation1 [shape = 'u32[144,128]{1,0:T(1,128)}', space=vmem, size = 0x12000, scoped, tag = 'internal scratch']
  %s0 = inlined_call_operand.hbm [shape: f32[8,16], index: 0, kind: input, shape index: {}]
  %s1 = inlined_call_operand.hbm [shape: f32[8,24], index: 1, kind: input, shape index: {}]
  %s2 = inlined_call_operand.hbm [shape: f32[16,32], index: 2, kind: input, shape index: {}]
  %s3 = inlined_call_operand.hbm [shape: f32[24,32], index: 3, kind: input, shape index: {}]
  %s4 = inlined_call_operand.vmem [shape: f32[1,32], index: 4, kind: input, shape index: {}]
  %s5 = inlined_call_operand.vmem [shape: f32[1,32], index: 5, kind: input, shape index: {}]
  %s6 = inlined_call_operand.hbm [shape: f32[8,96], index: 6, kind: output, shape index: {}]
  %s7 = sld [smem:[#allocation0]]
  $region50: #{tpu_custom_call.1} parent=0
    _
  %s9 = ssub.s32 1, %s7
  %s10 = scalar_select 0, %s9, %s7
  $region1: #{tpu_custom_call.1} parent=0
    #allocation2 [shape = 'u8[4096]{0}', space=vmem, size = 0x1000, scoped, tag = 'input window, operand 0, single buffered']
    #allocation3 [shape = 's32[1]{0}', space=sflag, size = 0x4, scoped, tag = 'scoped memory for tpu_custom_call.1']
    #allocation4 [shape = 's32[1]{0}', space=sflag, size = 0x4, scoped, tag = 'scoped memory for tpu_custom_call.1']
    #allocation5 [shape = 'u8[4096]{0}', space=vmem, size = 0x1000, scoped, tag = 'input window, operand 1, single buffered']
    #allocation6 [shape = 's32[1]{0}', space=sflag, size = 0x4, scoped, tag = 'scoped memory for tpu_custom_call.1']
    #allocation7 [shape = 'u8[8192]{0}', space=vmem, size = 0x2000, scoped, tag = 'input window, operand 2, single buffered']
    #allocation8 [shape = 'u8[12288]{0}', space=vmem, size = 0x3000, scoped, tag = 'input window, operand 3, single buffered']
    #allocation9 [shape = 's32[1]{0}', space=sflag, size = 0x4, scoped, tag = 'scoped memory for tpu_custom_call.1']
    #allocation10 [shape = 'u8[4096]{0}', space=vmem, size = 0x1000, scoped, tag = 'output window, operand 0, single buffered']
    %11 = vsyncpa [#allocation3], 0
    %12 = vsyncpa [#allocation6], 0
    %13 = vsyncpa [#allocation9], 0
    %14 = vsyncpa [#allocation4], 0
    // Predicated region
    $region2: #{tpu_custom_call.1} parent=1 // pred_check
      _
    $region3: #{tpu_custom_call.1} parent=1 // pred_check_branch
      %16 = sbr.rel (0) target = $region5
    $region4: #{tpu_custom_call.1} parent=1 // pred_region
      %s18 = ssub.s32 128, 128
      %19 = vsyncadd [#allocation3], %s18
      %s21 = sshll.u32 [#allocation2], 4
      %s22 = int_to_ptr.vmem [resolvable:$true] %s21
      %24 = dma.hbm_to_vmem [thread:$0]  %s0, 128, %s22, [#allocation3]
    $region5: #{tpu_custom_call.1} parent=1 // pred_fallthru
      _
    // Predicated region
    $region6: #{tpu_custom_call.1} parent=1 // pred_check
      _
    $region7: #{tpu_custom_call.1} parent=1 // pred_check_branch
      %26 = sbr.rel (0) target = $region9
    $region8: #{tpu_custom_call.1} parent=1 // pred_region
      %s28 = ssub.s32 128, 128
      %29 = vsyncadd [#allocation6], %s28
      %s31 = sshll.u32 [#allocation5], 4
      %s32 = int_to_ptr.vmem [resolvable:$true] %s31
      %34 = dma.hbm_to_vmem [thread:$0]  %s1, 128, %s32, [#allocation6]
    $region9: #{tpu_custom_call.1} parent=1 // pred_fallthru
      _
    // Predicated region
    $region10: #{tpu_custom_call.1} parent=1 // pred_check
      _
    $region11: #{tpu_custom_call.1} parent=1 // pred_check_branch
      %36 = sbr.rel (0) target = $region13
    $region12: #{tpu_custom_call.1} parent=1 // pred_region
      %s38 = ssub.s32 256, 256
      %39 = vsyncadd [#allocation6], %s38
      %s40 = sshll.u32 [#allocation7], 4
      %s41 = int_to_ptr.vmem [resolvable:$true] %s40
      %46 = dma.hbm_to_vmem [thread:$0]  %s2, 256, %s41, [#allocation6], 128, 128, 8
    $region13: #{tpu_custom_call.1} parent=1 // pred_fallthru
      _
    // Predicated region
    $region14: #{tpu_custom_call.1} parent=1 // pred_check
      _
    $region15: #{tpu_custom_call.1} parent=1 // pred_check_branch
      %48 = sbr.rel (0) target = $region17
    $region16: #{tpu_custom_call.1} parent=1 // pred_region
      %s50 = ssub.s32 384, 384
      %51 = vsyncadd [#allocation9], %s50
      %s52 = sshll.u32 [#allocation8], 4
      %s53 = int_to_ptr.vmem [resolvable:$true] %s52
      %58 = dma.hbm_to_vmem [thread:$0]  %s3, 384, %s53, [#allocation9], 128, 128, 8
    $region17: #{tpu_custom_call.1} parent=1 // pred_fallthru
      _
    // Predicated region
    $region18: #{tpu_custom_call.1} parent=1 // pred_check
      _
    $region19: #{tpu_custom_call.1} parent=1 // pred_check_branch
      %60 = sbr.rel (0) target = $region21
    $region20: #{tpu_custom_call.1} parent=1 // pred_region
      _
    $region21: #{tpu_custom_call.1} parent=1 // pred_fallthru
      _
    // Predicated region
    $region22: #{tpu_custom_call.1} parent=1 // pred_check
      _
    $region23: #{tpu_custom_call.1} parent=1 // pred_check_branch
      %62 = sbr.rel (0) target = $region25
    $region24: #{tpu_custom_call.1} parent=1 // pred_region
      _
    $region25: #{tpu_custom_call.1} parent=1 // pred_fallthru
      _
    // Predicated region
    $region26: #{tpu_custom_call.1} parent=1 // pred_check
      _
    $region27: #{tpu_custom_call.1} parent=1 // pred_check_branch
      %64 = sbr.rel (0) target = $region29
    $region28: #{tpu_custom_call.1} parent=1 // pred_region
      %65 = dma.done [#allocation3], 128
    $region29: #{tpu_custom_call.1} parent=1 // pred_fallthru
      _
    // Predicated region
    $region30: #{tpu_custom_call.1} parent=1 // pred_check
      _
    $region31: #{tpu_custom_call.1} parent=1 // pred_check_branch
      %67 = sbr.rel (0) target = $region33
    $region32: #{tpu_custom_call.1} parent=1 // pred_region
      %68 = dma.done [#allocation6], 128
    $region33: #{tpu_custom_call.1} parent=1 // pred_fallthru
      _
    // Predicated region
    $region34: #{tpu_custom_call.1} parent=1 // pred_check
      _
    $region35: #{tpu_custom_call.1} parent=1 // pred_check_branch
      %70 = sbr.rel (0) target = $region37
    $region36: #{tpu_custom_call.1} parent=1 // pred_region
      %71 = dma.done [#allocation6], 256
    $region37: #{tpu_custom_call.1} parent=1 // pred_fallthru
      _
    // Predicated region
    $region38: #{tpu_custom_call.1} parent=1 // pred_check
      _
    $region39: #{tpu_custom_call.1} parent=1 // pred_check_branch
      %73 = sbr.rel (0) target = $region41
    $region40: #{tpu_custom_call.1} parent=1 // pred_region
      %74 = dma.done [#allocation9], 384
    $region41: #{tpu_custom_call.1} parent=1 // pred_fallthru
      _
    %v75 = vld [vmem:[#allocation2] sm:$0xff]
    %v76 = vld [vmem:[#allocation7] sm:$0xff]
    %v77 = vld [vmem:[#allocation7 + $0x8] sm:$0xff]
    %v78 = vld [vmem:[%s4] sm:$0x1]
    %v80 = vlaneseq
    %v81 = vshrl.u32 %v80, 7
    %v82 = vsub.s32 0, %v81
    %v83 = vrot.slane %v78, %v82
    %vm85 = vcmask 130048
    %v87 = vsel %vm85, %v75, 0
    %89 = vmatprep.subr.mxu0 0.0
    %90 = vmatpush1.msra.mxu0 %v76
    %91 = vmatprep.subr.mxu0 0.0
    %92 = vmatpush1.msra.mxu0 %v77
    %93 = vmatprep.subr.mxu0 0.0
    %94 = vmatpush1.msra.mxu0 0.0
    %95 = vmatprep.subr.mxu0 0.0
    %96 = vmatpush1.msra.mxu0 0.0
    %97 = vmatprep.subr.mxu0 0.0
    %98 = vmatpush1.msra.mxu0 0.0
    %99 = vmatprep.subr.mxu0 0.0
    %100 = vmatpush1.msra.mxu0 0.0
    %101 = vmatprep.subr.mxu0 0.0
    %102 = vmatpush1.msra.mxu0 0.0
    %103 = vmatprep.subr.mxu0 0.0
    %104 = vmatpush1.msra.mxu0 0.0
    %105 = vmatprep.subr.mxu0 0.0
    %106 = vmatpush1.msra.mxu0 0.0
    %107 = vmatprep.subr.mxu0 0.0
    %108 = vmatpush1.msra.mxu0 0.0
    %109 = vmatprep.subr.mxu0 0.0
    %110 = vmatpush1.msra.mxu0 0.0
    %111 = vmatprep.subr.mxu0 0.0
    %112 = vmatpush1.msra.mxu0 0.0
    %113 = vmatprep.subr.mxu0 0.0
    %114 = vmatpush1.msra.mxu0 0.0
    %115 = vmatprep.subr.mxu0 0.0
    %116 = vmatpush1.msra.mxu0 0.0
    %117 = vmatprep.subr.mxu0 0.0
    %118 = vmatpush1.msra.mxu0 0.0
    %119 = vmatprep.subr.mxu0 0.0
    %120 = vmatpush1.msra.mxu0 0.0
    %121 = vmatprep.subr.mxu0 0.0
    %122 = vmatpush1.msra.mxu0 0.0
    %123 = vmatprep.subr.mxu0 0.0
    %124 = vmatpush1.msra.mxu0 0.0
    %125 = vmatprep.subr.mxu0 0.0
    %126 = vmatpush1.msra.mxu0 0.0
    %127 = vmatprep.subr.mxu0 0.0
    %128 = vmatpush1.msra.mxu0 0.0
    %129 = vmatprep.subr.mxu0 0.0
    %130 = vmatpush1.msra.mxu0 0.0
    %131 = vmatprep.subr.mxu0 0.0
    %132 = vmatpush1.msra.mxu0 0.0
    %133 = vmatprep.subr.mxu0 0.0
    %134 = vmatpush1.msra.mxu0 0.0
    %135 = vmatprep.subr.mxu0 0.0
    %136 = vmatpush1.msra.mxu0 0.0
    %137 = vmatprep.subr.mxu0 0.0
    %138 = vmatpush1.msra.mxu0 0.0
    %139 = vmatprep.subr.mxu0 0.0
    %140 = vmatpush1.msra.mxu0 0.0
    %141 = vmatprep.subr.mxu0 0.0
    %142 = vmatpush1.msra.mxu0 0.0
    %143 = vmatprep.subr.mxu0 0.0
    %144 = vmatpush1.msra.mxu0 0.0
    %145 = vmatprep.subr.mxu0 0.0
    %146 = vmatpush1.msra.mxu0 0.0
    %147 = vmatprep.subr.mxu0 0.0
    %148 = vmatpush1.msra.mxu0 0.0
    %149 = vmatprep.subr.mxu0 0.0
    %150 = vmatpush1.msra.mxu0 0.0
    %151 = vmatprep.subr.mxu0 0.0
    %152 = vmatpush1.msra.mxu0 0.0
    %153 = vmatprep.mubr.f32.mxu0 0.0
    %154 = vmatmul.mubr.f32.gmra.mrb[0].mxu0 %v87
    %v155 = vpop.f32.mrb[0].mxu0
    %v156 = vadd.f32 %v83, %v155
    %v157 = vpop.f32.mrb[0].mxu0
    %158 = vdwg.mxu0
    %v159 = vmax.f32 %v156, 0.0
    %vm160 = vcmask 261120
    %161 = vst.msk [vmem:[#allocation10] sm:$0xff] %vm160, %v159
    %v162 = vld [vmem:[#allocation5] sm:$0xff]
    %v163 = vld [vmem:[#allocation8] sm:$0xff]
    %v164 = vld [vmem:[#allocation8 + $0x8] sm:$0xff]
    %v165 = vld [vmem:[#allocation8 + $0x10] sm:$0xff]
    %v166 = vld [vmem:[%s5] sm:$0x1]
    %v168 = vlaneseq
    %v169 = vshrl.u32 %v168, 7
    %v170 = vsub.s32 0, %v169
    %v171 = vrot.slane %v166, %v170
    %vm173 = vcmask 195584
    %v175 = vsel %vm173, %v162, 0
    %177 = vmatprep.subr.mxu0 0.0
    %178 = vmatpush1.msra.mxu0 %v163
    %179 = vmatprep.subr.mxu0 0.0
    %180 = vmatpush1.msra.mxu0 %v164
    %181 = vmatprep.subr.mxu0 0.0
    %182 = vmatpush1.msra.mxu0 %v165
    %183 = vmatprep.subr.mxu0 0.0
    %184 = vmatpush1.msra.mxu0 0.0
    %185 = vmatprep.subr.mxu0 0.0
    %186 = vmatpush1.msra.mxu0 0.0
    %187 = vmatprep.subr.mxu0 0.0
    %188 = vmatpush1.msra.mxu0 0.0
    %189 = vmatprep.subr.mxu0 0.0
    %190 = vmatpush1.msra.mxu0 0.0
    %191 = vmatprep.subr.mxu0 0.0
    %192 = vmatpush1.msra.mxu0 0.0
    %193 = vmatprep.subr.mxu0 0.0
    %194 = vmatpush1.msra.mxu0 0.0
    %195 = vmatprep.subr.mxu0 0.0
    %196 = vmatpush1.msra.mxu0 0.0
    %197 = vmatprep.subr.mxu0 0.0
    %198 = vmatpush1.msra.mxu0 0.0
    %199 = vmatprep.subr.mxu0 0.0
    %200 = vmatpush1.msra.mxu0 0.0
    %201 = vmatprep.subr.mxu0 0.0
    %202 = vmatpush1.msra.mxu0 0.0
    %203 = vmatprep.subr.mxu0 0.0
    %204 = vmatpush1.msra.mxu0 0.0
    %205 = vmatprep.subr.mxu0 0.0
    %206 = vmatpush1.msra.mxu0 0.0
    %207 = vmatprep.subr.mxu0 0.0
    %208 = vmatpush1.msra.mxu0 0.0
    %209 = vmatprep.subr.mxu0 0.0
    %210 = vmatpush1.msra.mxu0 0.0
    %211 = vmatprep.subr.mxu0 0.0
    %212 = vmatpush1.msra.mxu0 0.0
    %213 = vmatprep.subr.mxu0 0.0
    %214 = vmatpush1.msra.mxu0 0.0
    %215 = vmatprep.subr.mxu0 0.0
    %216 = vmatpush1.msra.mxu0 0.0
    %217 = vmatprep.subr.mxu0 0.0
    %218 = vmatpush1.msra.mxu0 0.0
    %219 = vmatprep.subr.mxu0 0.0
    %220 = vmatpush1.msra.mxu0 0.0
    %221 = vmatprep.subr.mxu0 0.0
    %222 = vmatpush1.msra.mxu0 0.0
    %223 = vmatprep.subr.mxu0 0.0
    %224 = vmatpush1.msra.mxu0 0.0
    %225 = vmatprep.subr.mxu0 0.0
    %226 = vmatpush1.msra.mxu0 0.0
    %227 = vmatprep.subr.mxu0 0.0
    %228 = vmatpush1.msra.mxu0 0.0
    %229 = vmatprep.subr.mxu0 0.0
    %230 = vmatpush1.msra.mxu0 0.0
    %231 = vmatprep.subr.mxu0 0.0
    %232 = vmatpush1.msra.mxu0 0.0
    %233 = vmatprep.subr.mxu0 0.0
    %234 = vmatpush1.msra.mxu0 0.0
    %235 = vmatprep.subr.mxu0 0.0
    %236 = vmatpush1.msra.mxu0 0.0
    %237 = vmatprep.subr.mxu0 0.0
    %238 = vmatpush1.msra.mxu0 0.0
    %239 = vmatprep.subr.mxu0 0.0
    %240 = vmatpush1.msra.mxu0 0.0
    %241 = vmatprep.mubr.f32.mxu0 0.0
    %242 = vmatmul.mubr.f32.gmra.mrb[0].mxu0 %v175
    %v243 = vpop.f32.mrb[0].mxu0
    %v244 = vadd.f32 %v171, %v243
    %v245 = vpop.f32.mrb[0].mxu0
    %246 = vdwg.mxu0
    %v247 = vmax.f32 %v244, 0.0
    %249 = vrot.lane.b32.xlu0 %v247, 32
    %v250 = vpop.permute.xlu0 %249
    %vm252 = vcmask 523520
    %253 = vst.msk [vmem:[#allocation10] sm:$0xff] %vm252, %v250
    %v254 = vadd.f32 %v159, %v247
    %256 = vrot.lane.b32.xlu0 %v254, 64
    %v257 = vpop.permute.xlu0 %256
    %vm259 = vcmask 785920
    %260 = vst.msk [vmem:[#allocation10] sm:$0xff] %vm259, %v257
    // Predicated region
    $region42: #{tpu_custom_call.1} parent=1 // pred_check
      _
    $region43: #{tpu_custom_call.1} parent=1 // pred_check_branch
      %262 = sbr.rel (0) target = $region45
    $region44: #{tpu_custom_call.1} parent=1 // pred_region
      %s264 = ssub.s32 128, 128
      %265 = vsyncadd [#allocation4], %s264
      %s267 = sshll.u32 [#allocation10], 4
      %s268 = int_to_ptr.vmem [resolvable:$true] %s267
      %270 = dma.vmem_to_hbm [thread:$0]  %s268, 128, %s6, [#allocation4]
    $region45: #{tpu_custom_call.1} parent=1 // pred_fallthru
      _
    // Predicated region
    $region46: #{tpu_custom_call.1} parent=1 // pred_check
      _
    $region47: #{tpu_custom_call.1} parent=1 // pred_check_branch
      %272 = sbr.rel (0) target = $region49
    $region48: #{tpu_custom_call.1} parent=1 // pred_region
      %273 = dma.done [#allocation4], 128
    $region49: #{tpu_custom_call.1} parent=1 // pred_fallthru
      _
    %274 = vsyncpa [#allocation3], 1
    %275 = vsyncpa [#allocation6], 1
    %276 = vsyncpa [#allocation9], 1
    %277 = vsyncpa [#allocation4], 1

</llo_original>
